<compile_context>
chip_gen: v6e
topology: v6e:2x2x1
jax: 0.10.0
libtpu: 0.0.40
codegen_flags: <defaults>
</compile_context>

<pallas_src>
import functools

import jax
import jax.numpy as jnp
from jax.experimental import pallas as pl
from jax.experimental.pallas import tpu as pltpu

_LANE = 128


def _round_up(v, m):
    return ((v + m - 1) // m) * m


# ---------------------------------------------------------------- kernel -----

def _fused_mlp_kernel(x_ref, *rest, num_layers, compute_dtype):
    """One row-tile of the full MLP. rest = (W0, b0, W1, b1, ..., o_ref)."""
    o_ref = rest[-1]
    p = rest[:-1]

    # First linear (BN affine already folded on the host where applicable).
    h = jnp.dot(x_ref[...].astype(compute_dtype), p[0][...],
                preferred_element_type=jnp.float32) + p[1][...]

    for s in range(1, num_layers):
        h = jnp.maximum(h, 0.0)
        # TODO(synk): training-mode dropout (p>0) would need pltpu.prng_seed +
        # pltpu.stateful_bernoulli; p=0.0 / eval mode -> identity.
        h = jnp.dot(h.astype(compute_dtype), p[2 * s][...],
                    preferred_element_type=jnp.float32) + p[2 * s + 1][...]

    o_ref[...] = h.astype(o_ref.dtype)


# --------------------------------------------------------------- wrapper -----

def mlp_forward(x, params, *, relu_first=False, eps=1e-5, tile_target=512,
                compute_dtype=jnp.float32):
    N, c_in = x.shape
    dtype = x.dtype
    lins = params["lins"]
    norms = params["norms"]
    num_layers = len(lins)
    c_out = lins[-1][0].shape[1]

    # ---- host prep: fold eval-mode BN affine into an adjacent Linear (f32 math) ----
    Ws = [jnp.asarray(w, jnp.float32) for (w, _) in lins]
    bs = [jnp.asarray(b, jnp.float32).reshape(1, -1) for (_, b) in lins]
    for i, (gamma, beta, mean, var) in enumerate(norms):
        scale = gamma * jax.lax.rsqrt(var + eps)    # (1, C_{i+1})
        shift = beta - mean * scale                 # (1, C_{i+1})
        if relu_first:
            # relu -> BN -> lin[i+1]  ==  relu(h) @ (scale^T * W) + (shift @ W + b)
            bs[i + 1] = shift @ Ws[i + 1] + bs[i + 1]
            Ws[i + 1] = scale.reshape(-1, 1) * Ws[i + 1]
        else:
            # lin[i] -> BN  ==  h @ (W * scale) + (b * scale + shift)   (relu follows)
            bs[i] = bs[i] * scale + shift
            Ws[i] = Ws[i] * scale

    # ---- pad channel dims: output cols -> multiple of 128 lanes; hidden input rows
    #      -> previous padded width; first layer keeps the true c_in (no x pad). ----
    flat, specs = [], []
    row_p = c_in
    for li in range(num_layers):
        cout = Ws[li].shape[1]
        cout_p = _round_up(cout, _LANE)
        w = jnp.pad(Ws[li], ((0, row_p - Ws[li].shape[0]), (0, cout_p - cout)))
        b = jnp.pad(bs[li], ((0, 0), (0, cout_p - cout)))
        flat += [w.astype(compute_dtype), b]   # weights in compute dtype, biases f32
        specs += [pl.BlockSpec((row_p, cout_p), lambda i: (0, 0)),
                  pl.BlockSpec((1, cout_p), lambda i: (0, 0))]
        row_p = cout_p
    cout_final_p = row_p

    # ---- adaptive row tiling (tile_n always a multiple of 8) ----
    num_tiles = max(1, pl.cdiv(N, tile_target))
    if N >= 16:
        num_tiles = max(2, num_tiles)   # keep both v7x TensorCores busy
        num_tiles += num_tiles % 2      # even grid for balanced megacore split
    tile_n = _round_up(pl.cdiv(N, num_tiles), 8)
    n_pad = num_tiles * tile_n
    x_p = jnp.pad(x, ((0, n_pad - N), (0, 0)))   # pad rows only; channels stay c_in

    # ---- explicit VMEM budget: 2x x-tile + 2x out-tile + resident (2x-buffered)
    #      params + live f32 activations ----
    est = 2 * tile_n * c_in * x.dtype.itemsize
    est += 2 * tile_n * cout_final_p * jnp.dtype(dtype).itemsize
    est += sum(2 * a.size * a.dtype.itemsize for a in flat)
    est += 2 * tile_n * max(a.shape[-1] for a in flat) * 4
    vmem_bytes = int(min(64 * 2**20, max(32 * 2**20, 2 * est)))
    # TODO(synk): on v7x (64 MiB VMEM) with very wide hidden dims, single-buffer the
    # never-changing weight BlockSpecs or add a reduction grid axis instead of
    # keeping every layer resident.

    kernel = functools.partial(_fused_mlp_kernel, num_layers=num_layers,
                               compute_dtype=compute_dtype)

    out = pl.pallas_call(
        kernel,
        out_shape=jax.ShapeDtypeStruct((n_pad, cout_final_p), dtype),
        grid=(num_tiles,),
        in_specs=[pl.BlockSpec((tile_n, c_in), lambda i: (i, 0))] + specs,
        out_specs=pl.BlockSpec((tile_n, cout_final_p), lambda i: (i, 0)),
        compiler_params=pltpu.CompilerParams(
            dimension_semantics=("parallel",),
            vmem_limit_bytes=vmem_bytes),
    )(x_p, *flat)

    # NOTE: downstream consumers can take the lane-dense padded buffer directly and
    # slice lazily; the slice here is for API parity with the PyTorch module.
    return out[:N, :c_out]


# ----------------------------------------------------------------- params ----

def init_mlp_params(key, channel_list):
    """Deterministic synthetic parameters matching the module's shapes."""
    params = {"lins": [], "norms": []}
    for (cin, cout) in zip(channel_list[:-1], channel_list[1:]):
        key, kw, kb = jax.random.split(key, 3)
        bound = 1.0 / jnp.sqrt(cin)
        w = jax.random.uniform(kw, (cin, cout), jnp.float32, -bound, bound)
        b = jax.random.uniform(kb, (1, cout), jnp.float32, -bound, bound)
        params["lins"].append((w, b))
    for c in channel_list[1:-1]:
        key, kg, kb2, km, kv = jax.random.split(key, 5)
        gamma = 1.0 + 0.1 * jax.random.normal(kg, (1, c), jnp.float32)
        beta = 0.1 * jax.random.normal(kb2, (1, c), jnp.float32)
        run_mean = 0.1 * jax.random.normal(km, (1, c), jnp.float32)
        run_var = jnp.abs(1.0 + 0.1 * jax.random.normal(kv, (1, c), jnp.float32))
        params["norms"].append((gamma, beta, run_mean, run_var))
    return params


# -------------------------------------------------------------- reference ----

def mlp_forward_ref(x, params, *, relu_first=False, eps=1e-5):
    """Pure-JAX reference for correctness checking."""
    w0, b0 = params["lins"][0]
    h = x @ w0 + b0
    for (w, b), (gamma, beta, mean, var) in zip(params["lins"][1:],
                                                params["norms"]):
        if relu_first:
            h = jnp.maximum(h, 0.0)
        h = (h - mean) * jax.lax.rsqrt(var + eps) * gamma + beta
        if not relu_first:
            h = jnp.maximum(h, 0.0)
        h = h @ w + b
    return h


# ------------------------------------------------------------------- main ----

if __name__ == "__main__":
    channel_list = [16, 32, 32, 8]   # 3 linear layers, 2 BN layers
    N = 300                          # non-tile-multiple row count (exercises padding)

    key = jax.random.PRNGKey(0)
    key, kx = jax.random.split(key)
    x = jax.random.normal(kx, (N, channel_list[0]), jnp.float32)
    params = init_mlp_params(key, channel_list)

    ok = True
    for relu_first in (False, True):
        ref = mlp_forward_ref(x, params, relu_first=relu_first)

        # Exact f32 path.
        out = jax.block_until_ready(mlp_forward(x, params, relu_first=relu_first))
        if out.shape != (N, channel_list[-1]):
            ok = False
            print("bad shape", out.shape)
        err = float(jnp.max(jnp.abs(out - ref)))
        if not jnp.allclose(out, ref, atol=5e-4, rtol=5e-4):
            ok = False
            print("f32 mismatch (relu_first=%s): max abs err %g" % (relu_first, err))

        # bf16-operand path (bf16-native MXU on v5e/v6e/v7x), f32 accumulation.
        out_bf = jax.block_until_ready(
            mlp_forward(x, params, relu_first=relu_first,
                        compute_dtype=jnp.bfloat16))
        err_bf = float(jnp.max(jnp.abs(out_bf - ref)))
        if not jnp.allclose(out_bf, ref, atol=1e-1, rtol=1e-1):
            ok = False
            print("bf16 mismatch (relu_first=%s): max abs err %g"
                  % (relu_first, err_bf))

    if ok:
        print("KERNEL_OK")
</pallas_src>

<mosaic_0001>
module attributes {stable_mosaic.version = 11 : i64} {
  func.func @_fused_mlp_kernel(%arg0: i32, %arg1: memref<152x16xf32, #tpu.memory_space<vmem>>, %arg2: memref<16x128xf32, #tpu.memory_space<vmem>>, %arg3: memref<1x128xf32, #tpu.memory_space<vmem>>, %arg4: memref<128x128xf32, #tpu.memory_space<vmem>>, %arg5: memref<1x128xf32, #tpu.memory_space<vmem>>, %arg6: memref<128x128xf32, #tpu.memory_space<vmem>>, %arg7: memref<1x128xf32, #tpu.memory_space<vmem>>, %arg8: memref<152x128xf32, #tpu.memory_space<vmem>>) attributes {dimension_semantics = [#tpu.dimension_semantics<parallel>], iteration_bounds = array<i64: 2>, scalar_prefetch = 0 : i64, scratch_operands = 0 : i64, tpu.core_type = #tpu.core_type<tc>, window_params = [{transform_indices = @transform_0, window_bounds = array<i64: 152, 16>}, {pipeline_mode = #tpu.pipeline_mode<synchronous>, transform_indices = @transform_1, window_bounds = array<i64: 16, 128>}, {pipeline_mode = #tpu.pipeline_mode<synchronous>, transform_indices = @transform_2, window_bounds = array<i64: 1, 128>}, {pipeline_mode = #tpu.pipeline_mode<synchronous>, transform_indices = @transform_3, window_bounds = array<i64: 128, 128>}, {pipeline_mode = #tpu.pipeline_mode<synchronous>, transform_indices = @transform_4, window_bounds = array<i64: 1, 128>}, {pipeline_mode = #tpu.pipeline_mode<synchronous>, transform_indices = @transform_5, window_bounds = array<i64: 128, 128>}, {pipeline_mode = #tpu.pipeline_mode<synchronous>, transform_indices = @transform_6, window_bounds = array<i64: 1, 128>}, {transform_indices = @transform_7, window_bounds = array<i64: 152, 128>}]} {
    %c0 = arith.constant 0 : index
    %c0_0 = arith.constant 0 : index
    %0 = vector.load %arg1[%c0, %c0_0] : memref<152x16xf32, #tpu.memory_space<vmem>>, vector<152x16xf32>
    %c0_1 = arith.constant 0 : index
    %c0_2 = arith.constant 0 : index
    %1 = vector.load %arg2[%c0_1, %c0_2] : memref<16x128xf32, #tpu.memory_space<vmem>>, vector<16x128xf32>
    %cst = arith.constant dense<0.000000e+00> : vector<152x128xf32>
    %2 = tpu.matmul %0, %1, %cst {dimension_numbers = #tpu.dot_dimension_numbers<[1], [0], [0], [1], [0, 0, 1, 1], [], []>} : vector<152x16xf32>, vector<16x128xf32>, vector<152x128xf32> -> vector<152x128xf32>
    %c0_3 = arith.constant 0 : index
    %c0_4 = arith.constant 0 : index
    %3 = vector.load %arg3[%c0_3, %c0_4] : memref<1x128xf32, #tpu.memory_space<vmem>>, vector<1x128xf32>
    %4 = vector.broadcast %3 : vector<1x128xf32> to vector<152x128xf32>
    %5 = arith.addf %2, %4 : vector<152x128xf32>
    %cst_5 = arith.constant 0.000000e+00 : f32
    %6 = vector.broadcast %cst_5 : f32 to vector<152x128xf32>
    %7 = arith.maximumf %5, %6 : vector<152x128xf32>
    %c0_6 = arith.constant 0 : index
    %c0_7 = arith.constant 0 : index
    %8 = vector.load %arg4[%c0_6, %c0_7] : memref<128x128xf32, #tpu.memory_space<vmem>>, vector<128x128xf32>
    %cst_8 = arith.constant dense<0.000000e+00> : vector<152x128xf32>
    %9 = tpu.matmul %7, %8, %cst_8 {dimension_numbers = #tpu.dot_dimension_numbers<[1], [0], [0], [1], [0, 0, 1, 1], [], []>} : vector<152x128xf32>, vector<128x128xf32>, vector<152x128xf32> -> vector<152x128xf32>
    %c0_9 = arith.constant 0 : index
    %c0_10 = arith.constant 0 : index
    %10 = vector.load %arg5[%c0_9, %c0_10] : memref<1x128xf32, #tpu.memory_space<vmem>>, vector<1x128xf32>
    %11 = vector.broadcast %10 : vector<1x128xf32> to vector<152x128xf32>
    %12 = arith.addf %9, %11 : vector<152x128xf32>
    %cst_11 = arith.constant 0.000000e+00 : f32
    %13 = vector.broadcast %cst_11 : f32 to vector<152x128xf32>
    %14 = arith.maximumf %12, %13 : vector<152x128xf32>
    %c0_12 = arith.constant 0 : index
    %c0_13 = arith.constant 0 : index
    %15 = vector.load %arg6[%c0_12, %c0_13] : memref<128x128xf32, #tpu.memory_space<vmem>>, vector<128x128xf32>
    %cst_14 = arith.constant dense<0.000000e+00> : vector<152x128xf32>
    %16 = tpu.matmul %14, %15, %cst_14 {dimension_numbers = #tpu.dot_dimension_numbers<[1], [0], [0], [1], [0, 0, 1, 1], [], []>} : vector<152x128xf32>, vector<128x128xf32>, vector<152x128xf32> -> vector<152x128xf32>
    %c0_15 = arith.constant 0 : index
    %c0_16 = arith.constant 0 : index
    %17 = vector.load %arg7[%c0_15, %c0_16] : memref<1x128xf32, #tpu.memory_space<vmem>>, vector<1x128xf32>
    %18 = vector.broadcast %17 : vector<1x128xf32> to vector<152x128xf32>
    %19 = arith.addf %16, %18 : vector<152x128xf32>
    %c0_17 = arith.constant 0 : index
    %c0_18 = arith.constant 0 : index
    %20 = vector.load %arg8[%c0_17, %c0_18] : memref<152x128xf32, #tpu.memory_space<vmem>>, vector<152x128xf32>
    tpu.vector_store %arg8[%c0_17, %c0_18], %19 {strides = array<i32>} : memref<152x128xf32, #tpu.memory_space<vmem>>, vector<152x128xf32>,
    return
  }
  func.func @transform_0(%arg0: i32) -> (i32, i32) {
    %c0_i32 = arith.constant 0 : i32
    %c0_i32_0 = arith.constant 0 : i32
    return %arg0, %c0_i32 : i32, i32
  }
  func.func @transform_1(%arg0: i32) -> (i32, i32) {
    %c0_i32 = arith.constant 0 : i32
    %c0_i32_0 = arith.constant 0 : i32
    %c0_i32_1 = arith.constant 0 : i32
    return %c0_i32, %c0_i32_0 : i32, i32
  }
  func.func @transform_2(%arg0: i32) -> (i32, i32) {
    %c0_i32 = arith.constant 0 : i32
    %c0_i32_0 = arith.constant 0 : i32
    %c0_i32_1 = arith.constant 0 : i32
    return %c0_i32, %c0_i32_0 : i32, i32
  }
  func.func @transform_3(%arg0: i32) -> (i32, i32) {
    %c0_i32 = arith.constant 0 : i32
    %c0_i32_0 = arith.constant 0 : i32
    %c0_i32_1 = arith.constant 0 : i32
    return %c0_i32, %c0_i32_0 : i32, i32
  }
  func.func @transform_4(%arg0: i32) -> (i32, i32) {
    %c0_i32 = arith.constant 0 : i32
    %c0_i32_0 = arith.constant 0 : i32
    %c0_i32_1 = arith.constant 0 : i32
    return %c0_i32, %c0_i32_0 : i32, i32
  }
  func.func @transform_5(%arg0: i32) -> (i32, i32) {
    %c0_i32 = arith.constant 0 : i32
    %c0_i32_0 = arith.constant 0 : i32
    %c0_i32_1 = arith.constant 0 : i32
    return %c0_i32, %c0_i32_0 : i32, i32
  }
  func.func @transform_6(%arg0: i32) -> (i32, i32) {
    %c0_i32 = arith.constant 0 : i32
    %c0_i32_0 = arith.constant 0 : i32
    %c0_i32_1 = arith.constant 0 : i32
    return %c0_i32, %c0_i32_0 : i32, i32
  }
  func.func @transform_7(%arg0: i32) -> (i32, i32) {
    %c0_i32 = arith.constant 0 : i32
    %c0_i32_0 = arith.constant 0 : i32
    return %arg0, %c0_i32 : i32, i32
  }
}

</mosaic_0001>

<llo_original>
// kernel: tpu_custom_call.1
$region0: #{tpu_custom_call.1}
  #allocation0 [shape = 'u32[]', space=smem, size = 0x4, offset = 0x4, fixed_abs, tag = 'smem constant byte address 0x4 - core index']
  #allocation1 [shape = 'u32[144,128]{1,0:T(1,128)}', space=vmem, size = 0x12000, scoped, tag = 'internal scratch']
  %s0 = inlined_call_operand.vmem [shape: f32[304,16], index: 0, kind: input, shape index: {}]
  %s1 = inlined_call_operand.vmem [shape: f32[16,128], index: 1, kind: input, shape index: {}]
  %s2 = inlined_call_operand.vmem [shape: f32[1,128], index: 2, kind: input, shape index: {}]
  %s3 = inlined_call_operand.vmem [shape: f32[128,128], index: 3, kind: input, shape index: {}]
  %s4 = inlined_call_operand.vmem [shape: f32[1,128], index: 4, kind: input, shape index: {}]
  %s5 = inlined_call_operand.vmem [shape: f32[128,128], index: 5, kind: input, shape index: {}]
  %s6 = inlined_call_operand.vmem [shape: f32[1,128], index: 6, kind: input, shape index: {}]
  %s7 = inlined_call_operand.hbm [shape: f32[304,128], index: 7, kind: output, shape index: {}]
  %s8 = sld [smem:[#allocation0]]
  $region61: #{tpu_custom_call.1} parent=0
    _
  %s10 = ssub.s32 1, %s8
  %s11 = scalar_select 0, %s10, %s8
  $region1: #{tpu_custom_call.1} parent=0
    #allocation2 [shape = 'u8[155648]{0}', space=vmem, size = 0x26000, scoped, tag = 'output window, operand 0']
    #allocation3 [shape = 's32[2]{0}', space=sflag, size = 0x8, scoped, tag = 'scoped memory for tpu_custom_call.1']
    %12 = vsyncpa [#allocation3], 0
    %s13 = scalar_lea.sflag [#allocation3], 1
    %14 = vsyncpa %s13, 0
    loop: start=0, step=1, limit=4
    $region2: #{tpu_custom_call.1} parent=1 // loop_pre_header
      _
    $region3: #{tpu_custom_call.1} parent=1 // loop_header
      %s16 = sphi 0, %s20
      %p17 = scmp.ge.s32.totalorder %s16, 4
      %s26 = sphi 0, %s28
      %s29 = sphi 0, %s26
      %s30 = sphi 0, %s29
      %s46 = sphi 0, %s30
      %s50 = sphi 0, %s50
      %s52 = sphi 0, %s50
      %s53 = sphi 0, %s52
      %s67 = sphi 0, %s53
      %s71 = sphi 0, %s71
      %s73 = sphi 0, %s71
      %s74 = sphi 0, %s73
      %s88 = sphi 0, %s74
      %s92 = sphi 0, %s92
      %s94 = sphi 0, %s92
      %s95 = sphi 0, %s94
      %s109 = sphi 0, %s95
      %s113 = sphi 0, %s113
      %s115 = sphi 0, %s113
      %s116 = sphi 0, %s115
      %s130 = sphi 0, %s116
      %s134 = sphi 0, %s134
      %s136 = sphi 0, %s134
      %s137 = sphi 0, %s136
      %s151 = sphi 0, %s137
      %s155 = sphi 0, %s155
      %s157 = sphi 0, %s155
      %s158 = sphi 0, %s157
      %s172 = sphi 0, %s158
      %s178 = sphi 0, %s180
      %s181 = sphi 0, %s178
      %s182 = sphi 0, %s181
      %s198 = sphi 0, %s182
    $region4: #{tpu_custom_call.1} parent=1 // loop_header_branch
      %19 = sbr.rel (%p17) target = $region8
    $region5: #{tpu_custom_call.1} parent=1 // loop_body
      %s21 = ssub.s32 %s16, 1
      %s22 = ssub.s32 %s16, 2
      %s23 = sadd.s32 %s16, 1
      %s24 = ssub.s32 %s16, %s23
      %p25 = scmp.eq.s32.totalorder %s24, 0
      %s27 = sadd.s32 %s26, 1
      %s28 = scalar_select %p25, %s26, %s27
      %p31 = pneg %p25
      %p32 = scmp.eq.s32.totalorder %s16, 1
      %p33 = por %p31, %p32
      %p34 = scmp.ne.s32.totalorder %s26, %s29
      %p35 = scmp.eq.s32.totalorder %s16, 0
      %p36 = por %p34, %p35
      %p37 = scmp.ne.s32.totalorder %s26, %s29
      %p38 = scmp.eq.s32.totalorder %s21, 1
      %p39 = por %p37, %p38
      %p40 = scmp.ne.s32.totalorder %s29, %s30
      %p41 = scmp.eq.s32.totalorder %s21, 0
      %p42 = por %p40, %p41
      %p43 = scmp.ne.s32.totalorder %s29, %s30
      %p44 = scmp.eq.s32.totalorder %s22, 1
      %p45 = por %p43, %p44
      %p47 = scmp.ne.s32.totalorder %s30, %s46
      %p48 = scmp.eq.s32.totalorder %s22, 0
      %p49 = por %p47, %p48
      %s51 = sadd.s32 %s50, 1
      %p54 = scmp.eq.s32.totalorder %s16, 1
      %p55 = scmp.ne.s32.totalorder %s50, %s52
      %p56 = scmp.eq.s32.totalorder %s16, 0
      %p57 = por %p55, %p56
      %p58 = scmp.ne.s32.totalorder %s50, %s52
      %p59 = scmp.eq.s32.totalorder %s21, 1
      %p60 = por %p58, %p59
      %p61 = scmp.ne.s32.totalorder %s52, %s53
      %p62 = scmp.eq.s32.totalorder %s21, 0
      %p63 = por %p61, %p62
      %p64 = scmp.ne.s32.totalorder %s52, %s53
      %p65 = scmp.eq.s32.totalorder %s22, 1
      %p66 = por %p64, %p65
      %p68 = scmp.ne.s32.totalorder %s53, %s67
      %p69 = scmp.eq.s32.totalorder %s22, 0
      %p70 = por %p68, %p69
      %s72 = sadd.s32 %s71, 1
      %p75 = scmp.eq.s32.totalorder %s16, 1
      %p76 = scmp.ne.s32.totalorder %s71, %s73
      %p77 = scmp.eq.s32.totalorder %s16, 0
      %p78 = por %p76, %p77
      %p79 = scmp.ne.s32.totalorder %s71, %s73
      %p80 = scmp.eq.s32.totalorder %s21, 1
      %p81 = por %p79, %p80
      %p82 = scmp.ne.s32.totalorder %s73, %s74
      %p83 = scmp.eq.s32.totalorder %s21, 0
      %p84 = por %p82, %p83
      %p85 = scmp.ne.s32.totalorder %s73, %s74
      %p86 = scmp.eq.s32.totalorder %s22, 1
      %p87 = por %p85, %p86
      %p89 = scmp.ne.s32.totalorder %s74, %s88
      %p90 = scmp.eq.s32.totalorder %s22, 0
      %p91 = por %p89, %p90
      %s93 = sadd.s32 %s92, 1
      %p96 = scmp.eq.s32.totalorder %s16, 1
      %p97 = scmp.ne.s32.totalorder %s92, %s94
      %p98 = scmp.eq.s32.totalorder %s16, 0
      %p99 = por %p97, %p98
      %p100 = scmp.ne.s32.totalorder %s92, %s94
      %p101 = scmp.eq.s32.totalorder %s21, 1
      %p102 = por %p100, %p101
      %p103 = scmp.ne.s32.totalorder %s94, %s95
      %p104 = scmp.eq.s32.totalorder %s21, 0
      %p105 = por %p103, %p104
      %p106 = scmp.ne.s32.totalorder %s94, %s95
      %p107 = scmp.eq.s32.totalorder %s22, 1
      %p108 = por %p106, %p107
      %p110 = scmp.ne.s32.totalorder %s95, %s109
      %p111 = scmp.eq.s32.totalorder %s22, 0
      %p112 = por %p110, %p111
      %s114 = sadd.s32 %s113, 1
      %p117 = scmp.eq.s32.totalorder %s16, 1
      %p118 = scmp.ne.s32.totalorder %s113, %s115
      %p119 = scmp.eq.s32.totalorder %s16, 0
      %p120 = por %p118, %p119
      %p121 = scmp.ne.s32.totalorder %s113, %s115
      %p122 = scmp.eq.s32.totalorder %s21, 1
      %p123 = por %p121, %p122
      %p124 = scmp.ne.s32.totalorder %s115, %s116
      %p125 = scmp.eq.s32.totalorder %s21, 0
      %p126 = por %p124, %p125
      %p127 = scmp.ne.s32.totalorder %s115, %s116
      %p128 = scmp.eq.s32.totalorder %s22, 1
      %p129 = por %p127, %p128
      %p131 = scmp.ne.s32.totalorder %s116, %s130
      %p132 = scmp.eq.s32.totalorder %s22, 0
      %p133 = por %p131, %p132
      %s135 = sadd.s32 %s134, 1
      %p138 = scmp.eq.s32.totalorder %s16, 1
      %p139 = scmp.ne.s32.totalorder %s134, %s136
      %p140 = scmp.eq.s32.totalorder %s16, 0
      %p141 = por %p139, %p140
      %p142 = scmp.ne.s32.totalorder %s134, %s136
      %p143 = scmp.eq.s32.totalorder %s21, 1
      %p144 = por %p142, %p143
      %p145 = scmp.ne.s32.totalorder %s136, %s137
      %p146 = scmp.eq.s32.totalorder %s21, 0
      %p147 = por %p145, %p146
      %p148 = scmp.ne.s32.totalorder %s136, %s137
      %p149 = scmp.eq.s32.totalorder %s22, 1
      %p150 = por %p148, %p149
      %p152 = scmp.ne.s32.totalorder %s137, %s151
      %p153 = scmp.eq.s32.totalorder %s22, 0
      %p154 = por %p152, %p153
      %s156 = sadd.s32 %s155, 1
      %p159 = scmp.eq.s32.totalorder %s16, 1
      %p160 = scmp.ne.s32.totalorder %s155, %s157
      %p161 = scmp.eq.s32.totalorder %s16, 0
      %p162 = por %p160, %p161
      %p163 = scmp.ne.s32.totalorder %s155, %s157
      %p164 = scmp.eq.s32.totalorder %s21, 1
      %p165 = por %p163, %p164
      %p166 = scmp.ne.s32.totalorder %s157, %s158
      %p167 = scmp.eq.s32.totalorder %s21, 0
      %p168 = por %p166, %p167
      %p169 = scmp.ne.s32.totalorder %s157, %s158
      %p170 = scmp.eq.s32.totalorder %s22, 1
      %p171 = por %p169, %p170
      %p173 = scmp.ne.s32.totalorder %s158, %s172
      %p174 = scmp.eq.s32.totalorder %s22, 0
      %p175 = por %p173, %p174
      %s176 = ssub.s32 %s16, %s23
      %p177 = scmp.eq.s32.totalorder %s176, 0
      %s179 = sadd.s32 %s178, 1
      %s180 = scalar_select %p177, %s178, %s179
      %p183 = pneg %p177
      %p184 = scmp.eq.s32.totalorder %s16, 1
      %p185 = por %p183, %p184
      %p186 = scmp.ne.s32.totalorder %s178, %s181
      %p187 = scmp.eq.s32.totalorder %s16, 0
      %p188 = por %p186, %p187
      %p189 = scmp.ne.s32.totalorder %s178, %s181
      %p190 = scmp.eq.s32.totalorder %s21, 1
      %p191 = por %p189, %p190
      %p192 = scmp.ne.s32.totalorder %s181, %s182
      %p193 = scmp.eq.s32.totalorder %s21, 0
      %p194 = por %p192, %p193
      %p195 = scmp.ne.s32.totalorder %s181, %s182
      %p196 = scmp.eq.s32.totalorder %s22, 1
      %p197 = por %p195, %p196
      %p199 = scmp.ne.s32.totalorder %s182, %s198
      %p200 = scmp.eq.s32.totalorder %s22, 0
      %p201 = por %p199, %p200
      %p202 = scmp.le.s32.totalorder 1, %s16
      %p203 = scmp.lt.s32.totalorder %s16, 3
      %p204 = pnand %p202, %p203
      %p205 = pneg %p204
      // Predicated region
      $region9: #{tpu_custom_call.1} parent=5 // pred_check
        _
      $region10: #{tpu_custom_call.1} parent=5 // pred_check_branch
        %207 = sbr.rel (%p204) target = $region12
      $region11: #{tpu_custom_call.1} parent=5 // pred_region
        %s208 = ssub.s32 %s16, 1
        // Predicated region
        $region13: #{tpu_custom_call.1} parent=11 // pred_check
          %p209 = pneg %p63
        $region14: #{tpu_custom_call.1} parent=11 // pred_check_branch
          %211 = sbr.rel (%p209) target = $region16
        $region15: #{tpu_custom_call.1} parent=11 // pred_region
          _
        $region16: #{tpu_custom_call.1} parent=11 // pred_fallthru
          _
        // Predicated region
        $region17: #{tpu_custom_call.1} parent=11 // pred_check
          %p212 = pneg %p84
        $region18: #{tpu_custom_call.1} parent=11 // pred_check_branch
          %214 = sbr.rel (%p212) target = $region20
        $region19: #{tpu_custom_call.1} parent=11 // pred_region
          _
        $region20: #{tpu_custom_call.1} parent=11 // pred_fallthru
          _
        // Predicated region
        $region21: #{tpu_custom_call.1} parent=11 // pred_check
          %p215 = pneg %p105
        $region22: #{tpu_custom_call.1} parent=11 // pred_check_branch
          %217 = sbr.rel (%p215) target = $region24
        $region23: #{tpu_custom_call.1} parent=11 // pred_region
          _
        $region24: #{tpu_custom_call.1} parent=11 // pred_fallthru
          _
        // Predicated region
        $region25: #{tpu_custom_call.1} parent=11 // pred_check
          %p218 = pneg %p126
        $region26: #{tpu_custom_call.1} parent=11 // pred_check_branch
          %220 = sbr.rel (%p218) target = $region28
        $region27: #{tpu_custom_call.1} parent=11 // pred_region
          _
        $region28: #{tpu_custom_call.1} parent=11 // pred_fallthru
          _
        // Predicated region
        $region29: #{tpu_custom_call.1} parent=11 // pred_check
          %p221 = pneg %p147
        $region30: #{tpu_custom_call.1} parent=11 // pred_check_branch
          %223 = sbr.rel (%p221) target = $region32
        $region31: #{tpu_custom_call.1} parent=11 // pred_region
          _
        $region32: #{tpu_custom_call.1} parent=11 // pred_fallthru
          _
        // Predicated region
        $region33: #{tpu_custom_call.1} parent=11 // pred_check
          %p224 = pneg %p168
        $region34: #{tpu_custom_call.1} parent=11 // pred_check_branch
          %226 = sbr.rel (%p224) target = $region36
        $region35: #{tpu_custom_call.1} parent=11 // pred_region
          _
        $region36: #{tpu_custom_call.1} parent=11 // pred_fallthru
          _
      $region12: #{tpu_custom_call.1} parent=5 // pred_fallthru
        _
      %p227 = scmp.lt.s32.totalorder %s16, 2
      // Predicated region
      $region37: #{tpu_custom_call.1} parent=5 // pred_check
        %p228 = pneg %p227
      $region38: #{tpu_custom_call.1} parent=5 // pred_check_branch
        %230 = sbr.rel (%p228) target = $region40
      $region39: #{tpu_custom_call.1} parent=5 // pred_region
        // Predicated region
        $region41: #{tpu_custom_call.1} parent=39 // pred_check
          %p231 = pneg %p36
        $region42: #{tpu_custom_call.1} parent=39 // pred_check_branch
          %233 = sbr.rel (%p231) target = $region44
        $region43: #{tpu_custom_call.1} parent=39 // pred_region
          %s234 = smul.u32 19, %s16
          %p235 = scmp.lt.s32.totalorder %s234, 37
          %s236 = scalar_select %p235, %s234, 37
          %s237 = smul.addr %s236, 8
          %s238 = scalar_lea.vmem %s0, %s237
          %s239 = smul.u32 19, %s16
        $region44: #{tpu_custom_call.1} parent=39 // pred_fallthru
          _
      $region40: #{tpu_custom_call.1} parent=5 // pred_fallthru
        _
      %p240 = scmp.le.s32.totalorder 1, %s16
      %p241 = scmp.lt.s32.totalorder %s16, 3
      %p242 = pnand %p240, %p241
      %p243 = pneg %p242
      // Predicated region
      $region45: #{tpu_custom_call.1} parent=5 // pred_check
        _
      $region46: #{tpu_custom_call.1} parent=5 // pred_check_branch
        %245 = sbr.rel (%p242) target = $region48
      $region47: #{tpu_custom_call.1} parent=5 // pred_region
        %s246 = ssub.s32 %s16, 1
        %s247 = smul.u32 19, %s21
        %p248 = scmp.lt.s32.totalorder %s247, 37
        %s249 = scalar_select %p248, %s247, 37
        %s250 = smul.addr %s249, 8
        %s251 = scalar_lea.vmem %s0, %s250
        %p252 = pneg %p42
        %p253 = pneg %p39
        %p254 = pneg %p63
        %p255 = pneg %p60
        %p256 = pneg %p84
        %p257 = pneg %p81
        %p258 = pneg %p105
        %p259 = pneg %p102
        %p260 = pneg %p126
        %p261 = pneg %p123
        %p262 = pneg %p147
        %p263 = pneg %p144
        %p264 = pneg %p168
        %p265 = pneg %p165
        %p266 = pneg %p194
        %p267 = pneg %p191
        %s268 = sand.u32 %s181, 1
        %s269 = scalar_lea.sflag [#allocation3], %s268
        %s270 = sand.u32 %s181, 1
        %s271 = smul.addr %s270, 152
        %s272 = scalar_lea.vmem [#allocation2], %s271
        %s273 = smul.u32 19, %s21
        %p274 = scmp.lt.s32.totalorder %s273, 37
        %s275 = scalar_select %p274, %s273, 37
        %s276 = smul.addr %s275, 8
        %s277 = scalar_lea.vmem %s0, %s276
        %s278 = smul.u32 19, %s21
        %s279 = smul.u32 19, %s21
        %v280 = vld [vmem:[%s277] sm:$0xff]
        %v281 = vld [vmem:[%s277 + $0x8] sm:$0xff]
        %v282 = vld [vmem:[%s277 + $0x10] sm:$0xff]
        %v283 = vld [vmem:[%s277 + $0x18] sm:$0xff]
        %v284 = vld [vmem:[%s277 + $0x20] sm:$0xff]
        %v285 = vld [vmem:[%s277 + $0x28] sm:$0xff]
        %v286 = vld [vmem:[%s277 + $0x30] sm:$0xff]
        %v287 = vld [vmem:[%s277 + $0x38] sm:$0xff]
        %v288 = vld [vmem:[%s277 + $0x40] sm:$0xff]
        %v289 = vld [vmem:[%s277 + $0x48] sm:$0xff]
        %v290 = vld [vmem:[%s277 + $0x50] sm:$0xff]
        %v291 = vld [vmem:[%s277 + $0x58] sm:$0xff]
        %v292 = vld [vmem:[%s277 + $0x60] sm:$0xff]
        %v293 = vld [vmem:[%s277 + $0x68] sm:$0xff]
        %v294 = vld [vmem:[%s277 + $0x70] sm:$0xff]
        %v295 = vld [vmem:[%s277 + $0x78] sm:$0xff]
        %v296 = vld [vmem:[%s277 + $0x80] sm:$0xff]
        %v297 = vld [vmem:[%s277 + $0x88] sm:$0xff]
        %v298 = vld [vmem:[%s277 + $0x90] sm:$0xff]
        %v299 = vld [vmem:[%s1] sm:$0xff]
        %v300 = vld [vmem:[%s1 + $0x8] sm:$0xff]
        %v301 = vld [vmem:[%s2] sm:$0x1]
        %v303 = vlaneseq
        %v304 = vshrl.u32 %v303, 7
        %v305 = vsub.s32 0, %v304
        %v306 = vrot.slane %v301, %v305
        %vm308 = vcmask 130048
        %v310 = vsel %vm308, %v280, 0
        %v313 = vsel %vm308, %v281, 0
        %v316 = vsel %vm308, %v282, 0
        %v319 = vsel %vm308, %v283, 0
        %v322 = vsel %vm308, %v284, 0
        %v325 = vsel %vm308, %v285, 0
        %v328 = vsel %vm308, %v286, 0
        %v331 = vsel %vm308, %v287, 0
        %v334 = vsel %vm308, %v288, 0
        %v337 = vsel %vm308, %v289, 0
        %v340 = vsel %vm308, %v290, 0
        %v343 = vsel %vm308, %v291, 0
        %v346 = vsel %vm308, %v292, 0
        %v349 = vsel %vm308, %v293, 0
        %v352 = vsel %vm308, %v294, 0
        %v355 = vsel %vm308, %v295, 0
        %v358 = vsel %vm308, %v296, 0
        %v361 = vsel %vm308, %v297, 0
        %v364 = vsel %vm308, %v298, 0
        %366 = vmatprep.subr.mxu0 0.0
        %367 = vmatpush1.msra.mxu0 0.0
        %368 = vmatprep.subr.mxu0 0.0
        %369 = vmatpush1.msra.mxu0 0.0
        %370 = vmatprep.subr.mxu0 0.0
        %371 = vmatpush1.msra.mxu0 0.0
        %372 = vmatprep.subr.mxu0 0.0
        %373 = vmatpush1.msra.mxu0 0.0
        %374 = vmatprep.subr.mxu0 0.0
        %375 = vmatpush1.msra.mxu0 0.0
        %376 = vmatprep.subr.mxu0 0.0
        %377 = vmatpush1.msra.mxu0 0.0
        %378 = vmatprep.subr.mxu0 0.0
        %379 = vmatpush1.msra.mxu0 0.0
        %380 = vmatprep.subr.mxu0 0.0
        %381 = vmatpush1.msra.mxu0 0.0
        %382 = vmatprep.subr.mxu0 0.0
        %383 = vmatpush1.msra.mxu0 0.0
        %384 = vmatprep.subr.mxu0 0.0
        %385 = vmatpush1.msra.mxu0 0.0
        %386 = vmatprep.subr.mxu0 0.0
        %387 = vmatpush1.msra.mxu0 0.0
        %388 = vmatprep.subr.mxu0 0.0
        %389 = vmatpush1.msra.mxu0 0.0
        %390 = vmatprep.subr.mxu0 0.0
        %391 = vmatpush1.msra.mxu0 0.0
        %392 = vmatprep.subr.mxu0 0.0
        %393 = vmatpush1.msra.mxu0 0.0
        %394 = vmatprep.subr.mxu0 0.0
        %395 = vmatpush1.msra.mxu0 %v300
        %396 = vmatprep.subr.mxu0 0.0
        %397 = vmatpush1.msra.mxu0 %v299
        %398 = vmatprep.subr.mxu0 0.0
        %399 = vmatpush2.msra.mxu0 0.0
        %400 = vmatprep.subr.mxu0 0.0
        %401 = vmatpush2.msra.mxu0 0.0
        %402 = vmatprep.subr.mxu0 0.0
        %403 = vmatpush2.msra.mxu0 0.0
        %404 = vmatprep.subr.mxu0 0.0
        %405 = vmatpush2.msra.mxu0 0.0
        %406 = vmatprep.subr.mxu0 0.0
        %407 = vmatpush2.msra.mxu0 0.0
        %408 = vmatprep.subr.mxu0 0.0
        %409 = vmatpush2.msra.mxu0 0.0
        %410 = vmatprep.subr.mxu0 0.0
        %411 = vmatpush2.msra.mxu0 0.0
        %412 = vmatprep.subr.mxu0 0.0
        %413 = vmatpush2.msra.mxu0 0.0
        %414 = vmatprep.subr.mxu0 0.0
        %415 = vmatpush2.msra.mxu0 0.0
        %416 = vmatprep.subr.mxu0 0.0
        %417 = vmatpush2.msra.mxu0 0.0
        %418 = vmatprep.subr.mxu0 0.0
        %419 = vmatpush2.msra.mxu0 0.0
        %420 = vmatprep.subr.mxu0 0.0
        %421 = vmatpush2.msra.mxu0 0.0
        %422 = vmatprep.subr.mxu0 0.0
        %423 = vmatpush2.msra.mxu0 0.0
        %424 = vmatprep.subr.mxu0 0.0
        %425 = vmatpush2.msra.mxu0 0.0
        %426 = vmatprep.subr.mxu0 0.0
        %427 = vmatpush2.msra.mxu0 0.0
        %428 = vmatprep.subr.mxu0 0.0
        %429 = vmatpush2.msra.mxu0 0.0
        %430 = vmatprep.mubr.f32.mxu0 0.0
        %431 = vmatmul.mubr.f32.gmra.mxu0 %v310
        %v432 = vpop.f32.mrf.mxu0
        %v433 = vadd.f32 %v306, %v432
        %v434 = vpop.f32.mrf.mxu0
        %435 = vmatprep.mubr.f32.mxu0 0.0
        %436 = vmatmul.mubr.f32.gmra.mxu0 %v313
        %v437 = vpop.f32.mrf.mxu0
        %v438 = vadd.f32 %v306, %v437
        %v439 = vpop.f32.mrf.mxu0
        %440 = vmatprep.mubr.f32.mxu0 0.0
        %441 = vmatmul.mubr.f32.gmra.mxu0 %v316
        %v442 = vpop.f32.mrf.mxu0
        %v443 = vadd.f32 %v306, %v442
        %v444 = vpop.f32.mrf.mxu0
        %445 = vmatprep.mubr.f32.mxu0 0.0
        %446 = vmatmul.mubr.f32.gmra.mxu0 %v319
        %v447 = vpop.f32.mrf.mxu0
        %v448 = vadd.f32 %v306, %v447
        %v449 = vpop.f32.mrf.mxu0
        %450 = vmatprep.mubr.f32.mxu0 0.0
        %451 = vmatmul.mubr.f32.gmra.mxu0 %v322
        %v452 = vpop.f32.mrf.mxu0
        %v453 = vadd.f32 %v306, %v452
        %v454 = vpop.f32.mrf.mxu0
        %455 = vmatprep.mubr.f32.mxu0 0.0
        %456 = vmatmul.mubr.f32.gmra.mxu0 %v325
        %v457 = vpop.f32.mrf.mxu0
        %v458 = vadd.f32 %v306, %v457
        %v459 = vpop.f32.mrf.mxu0
        %460 = vmatprep.mubr.f32.mxu0 0.0
        %461 = vmatmul.mubr.f32.gmra.mxu0 %v328
        %v462 = vpop.f32.mrf.mxu0
        %v463 = vadd.f32 %v306, %v462
        %v464 = vpop.f32.mrf.mxu0
        %465 = vmatprep.mubr.f32.mxu0 0.0
        %466 = vmatmul.mubr.f32.gmra.mxu0 %v331
        %v467 = vpop.f32.mrf.mxu0
        %v468 = vadd.f32 %v306, %v467
        %v469 = vpop.f32.mrf.mxu0
        %470 = vmatprep.mubr.f32.mxu0 0.0
        %471 = vmatmul.mubr.f32.gmra.mxu0 %v334
        %v472 = vpop.f32.mrf.mxu0
        %v473 = vadd.f32 %v306, %v472
        %v474 = vpop.f32.mrf.mxu0
        %475 = vmatprep.mubr.f32.mxu0 0.0
        %476 = vmatmul.mubr.f32.gmra.mxu0 %v337
        %v477 = vpop.f32.mrf.mxu0
        %v478 = vadd.f32 %v306, %v477
        %v479 = vpop.f32.mrf.mxu0
        %480 = vmatprep.mubr.f32.mxu0 0.0
        %481 = vmatmul.mubr.f32.gmra.mxu0 %v340
        %v482 = vpop.f32.mrf.mxu0
        %v483 = vadd.f32 %v306, %v482
        %v484 = vpop.f32.mrf.mxu0
        %485 = vmatprep.mubr.f32.mxu0 0.0
        %486 = vmatmul.mubr.f32.gmra.mxu0 %v343
        %v487 = vpop.f32.mrf.mxu0
        %v488 = vadd.f32 %v306, %v487
        %v489 = vpop.f32.mrf.mxu0
        %490 = vmatprep.mubr.f32.mxu0 0.0
        %491 = vmatmul.mubr.f32.gmra.mxu0 %v346
        %v492 = vpop.f32.mrf.mxu0
        %v493 = vadd.f32 %v306, %v492
        %v494 = vpop.f32.mrf.mxu0
        %495 = vmatprep.mubr.f32.mxu0 0.0
        %496 = vmatmul.mubr.f32.gmra.mxu0 %v349
        %v497 = vpop.f32.mrf.mxu0
        %v498 = vadd.f32 %v306, %v497
        %v499 = vpop.f32.mrf.mxu0
        %500 = vmatprep.mubr.f32.mxu0 0.0
        %501 = vmatmul.mubr.f32.gmra.mxu0 %v352
        %v502 = vpop.f32.mrf.mxu0
        %v503 = vadd.f32 %v306, %v502
        %v504 = vpop.f32.mrf.mxu0
        %505 = vmatprep.mubr.f32.mxu0 0.0
        %506 = vmatmul.mubr.f32.gmra.mxu0 %v355
        %v507 = vpop.f32.mrf.mxu0
        %v508 = vadd.f32 %v306, %v507
        %v509 = vpop.f32.mrf.mxu0
        %510 = vmatprep.mubr.f32.mxu0 0.0
        %511 = vmatmul.mubr.f32.gmra.mxu0 %v358
        %v512 = vpop.f32.mrf.mxu0
        %v513 = vadd.f32 %v306, %v512
        %v514 = vpop.f32.mrf.mxu0
        %515 = vmatprep.mubr.f32.mxu0 0.0
        %516 = vmatmul.mubr.f32.gmra.mxu0 %v361
        %v517 = vpop.f32.mrf.mxu0
        %v518 = vadd.f32 %v306, %v517
        %v519 = vpop.f32.mrf.mxu0
        %520 = vmatprep.mubr.f32.mxu0 0.0
        %521 = vmatmul.mubr.f32.gmra.mxu0 %v364
        %v522 = vpop.f32.mrf.mxu0
        %v523 = vadd.f32 %v306, %v522
        %v524 = vpop.f32.mrf.mxu0
        %525 = vdwg.mxu0
        %v526 = vmax.f32 %v433, 0.0
        %v527 = vmax.f32 %v438, 0.0
        %v528 = vmax.f32 %v443, 0.0
        %v529 = vmax.f32 %v448, 0.0
        %v530 = vmax.f32 %v453, 0.0
        %v531 = vmax.f32 %v458, 0.0
        %v532 = vmax.f32 %v463, 0.0
        %v533 = vmax.f32 %v468, 0.0
        %v534 = vmax.f32 %v473, 0.0
        %v535 = vmax.f32 %v478, 0.0
        %v536 = vmax.f32 %v483, 0.0
        %v537 = vmax.f32 %v488, 0.0
        %v538 = vmax.f32 %v493, 0.0
        %v539 = vmax.f32 %v498, 0.0
        %v540 = vmax.f32 %v503, 0.0
        %v541 = vmax.f32 %v508, 0.0
        %v542 = vmax.f32 %v513, 0.0
        %v543 = vmax.f32 %v518, 0.0
        %v544 = vmax.f32 %v523, 0.0
        %v545 = vld [vmem:[%s3] sm:$0xff]
        %v546 = vld [vmem:[%s3 + $0x8] sm:$0xff]
        %v547 = vld [vmem:[%s3 + $0x10] sm:$0xff]
        %v548 = vld [vmem:[%s3 + $0x18] sm:$0xff]
        %v549 = vld [vmem:[%s3 + $0x20] sm:$0xff]
        %v550 = vld [vmem:[%s3 + $0x28] sm:$0xff]
        %v551 = vld [vmem:[%s3 + $0x30] sm:$0xff]
        %v552 = vld [vmem:[%s3 + $0x38] sm:$0xff]
        %v553 = vld [vmem:[%s3 + $0x40] sm:$0xff]
        %v554 = vld [vmem:[%s3 + $0x48] sm:$0xff]
        %v555 = vld [vmem:[%s3 + $0x50] sm:$0xff]
        %v556 = vld [vmem:[%s3 + $0x58] sm:$0xff]
        %v557 = vld [vmem:[%s3 + $0x60] sm:$0xff]
        %v558 = vld [vmem:[%s3 + $0x68] sm:$0xff]
        %v559 = vld [vmem:[%s3 + $0x70] sm:$0xff]
        %v560 = vld [vmem:[%s3 + $0x78] sm:$0xff]
        %v561 = vld [vmem:[%s4] sm:$0x1]
        %v563 = vlaneseq
        %v564 = vshrl.u32 %v563, 7
        %v565 = vsub.s32 0, %v564
        %v566 = vrot.slane %v561, %v565
        %568 = vmatprep.subr.mxu0 0.0
        %569 = vmatpush1.msra.mxu0 %v560
        %570 = vmatprep.subr.mxu0 0.0
        %571 = vmatpush1.msra.mxu0 %v559
        %572 = vmatprep.subr.mxu0 0.0
        %573 = vmatpush1.msra.mxu0 %v558
        %574 = vmatprep.subr.mxu0 0.0
        %575 = vmatpush1.msra.mxu0 %v557
        %576 = vmatprep.subr.mxu0 0.0
        %577 = vmatpush1.msra.mxu0 %v556
        %578 = vmatprep.subr.mxu0 0.0
        %579 = vmatpush1.msra.mxu0 %v555
        %580 = vmatprep.subr.mxu0 0.0
        %581 = vmatpush1.msra.mxu0 %v554
        %582 = vmatprep.subr.mxu0 0.0
        %583 = vmatpush1.msra.mxu0 %v553
        %584 = vmatprep.subr.mxu0 0.0
        %585 = vmatpush1.msra.mxu0 %v552
        %586 = vmatprep.subr.mxu0 0.0
        %587 = vmatpush1.msra.mxu0 %v551
        %588 = vmatprep.subr.mxu0 0.0
        %589 = vmatpush1.msra.mxu0 %v550
        %590 = vmatprep.subr.mxu0 0.0
        %591 = vmatpush1.msra.mxu0 %v549
        %592 = vmatprep.subr.mxu0 0.0
        %593 = vmatpush1.msra.mxu0 %v548
        %594 = vmatprep.subr.mxu0 0.0
        %595 = vmatpush1.msra.mxu0 %v547
        %596 = vmatprep.subr.mxu0 0.0
        %597 = vmatpush1.msra.mxu0 %v546
        %598 = vmatprep.subr.mxu0 0.0
        %599 = vmatpush1.msra.mxu0 %v545
        %600 = vmatprep.subr.mxu0 0.0
        %601 = vmatpush2.msra.mxu0 0.0
        %602 = vmatprep.subr.mxu0 0.0
        %603 = vmatpush2.msra.mxu0 0.0
        %604 = vmatprep.subr.mxu0 0.0
        %605 = vmatpush2.msra.mxu0 0.0
        %606 = vmatprep.subr.mxu0 0.0
        %607 = vmatpush2.msra.mxu0 0.0
        %608 = vmatprep.subr.mxu0 0.0
        %609 = vmatpush2.msra.mxu0 0.0
        %610 = vmatprep.subr.mxu0 0.0
        %611 = vmatpush2.msra.mxu0 0.0
        %612 = vmatprep.subr.mxu0 0.0
        %613 = vmatpush2.msra.mxu0 0.0
        %614 = vmatprep.subr.mxu0 0.0
        %615 = vmatpush2.msra.mxu0 0.0
        %616 = vmatprep.subr.mxu0 0.0
        %617 = vmatpush2.msra.mxu0 0.0
        %618 = vmatprep.subr.mxu0 0.0
        %619 = vmatpush2.msra.mxu0 0.0
        %620 = vmatprep.subr.mxu0 0.0
        %621 = vmatpush2.msra.mxu0 0.0
        %622 = vmatprep.subr.mxu0 0.0
        %623 = vmatpush2.msra.mxu0 0.0
        %624 = vmatprep.subr.mxu0 0.0
        %625 = vmatpush2.msra.mxu0 0.0
        %626 = vmatprep.subr.mxu0 0.0
        %627 = vmatpush2.msra.mxu0 0.0
        %628 = vmatprep.subr.mxu0 0.0
        %629 = vmatpush2.msra.mxu0 0.0
        %630 = vmatprep.subr.mxu0 0.0
        %631 = vmatpush2.msra.mxu0 0.0
        %632 = vmatprep.mubr.f32.mxu0 0.0
        %633 = vmatmul.mubr.f32.gmra.mxu0 %v526
        %v634 = vpop.f32.mrf.mxu0
        %v635 = vadd.f32 %v566, %v634
        %v636 = vpop.f32.mrf.mxu0
        %637 = vmatprep.mubr.f32.mxu0 0.0
        %638 = vmatmul.mubr.f32.gmra.mxu0 %v527
        %v639 = vpop.f32.mrf.mxu0
        %v640 = vadd.f32 %v566, %v639
        %v641 = vpop.f32.mrf.mxu0
        %642 = vmatprep.mubr.f32.mxu0 0.0
        %643 = vmatmul.mubr.f32.gmra.mxu0 %v528
        %v644 = vpop.f32.mrf.mxu0
        %v645 = vadd.f32 %v566, %v644
        %v646 = vpop.f32.mrf.mxu0
        %647 = vmatprep.mubr.f32.mxu0 0.0
        %648 = vmatmul.mubr.f32.gmra.mxu0 %v529
        %v649 = vpop.f32.mrf.mxu0
        %v650 = vadd.f32 %v566, %v649
        %v651 = vpop.f32.mrf.mxu0
        %652 = vmatprep.mubr.f32.mxu0 0.0
        %653 = vmatmul.mubr.f32.gmra.mxu0 %v530
        %v654 = vpop.f32.mrf.mxu0
        %v655 = vadd.f32 %v566, %v654
        %v656 = vpop.f32.mrf.mxu0
        %657 = vmatprep.mubr.f32.mxu0 0.0
        %658 = vmatmul.mubr.f32.gmra.mxu0 %v531
        %v659 = vpop.f32.mrf.mxu0
        %v660 = vadd.f32 %v566, %v659
        %v661 = vpop.f32.mrf.mxu0
        %662 = vmatprep.mubr.f32.mxu0 0.0
        %663 = vmatmul.mubr.f32.gmra.mxu0 %v532
        %v664 = vpop.f32.mrf.mxu0
        %v665 = vadd.f32 %v566, %v664
        %v666 = vpop.f32.mrf.mxu0
        %667 = vmatprep.mubr.f32.mxu0 0.0
        %668 = vmatmul.mubr.f32.gmra.mxu0 %v533
        %v669 = vpop.f32.mrf.mxu0
        %v670 = vadd.f32 %v566, %v669
        %v671 = vpop.f32.mrf.mxu0
        %672 = vmatprep.mubr.f32.mxu0 0.0
        %673 = vmatmul.mubr.f32.gmra.mxu0 %v534
        %v674 = vpop.f32.mrf.mxu0
        %v675 = vadd.f32 %v566, %v674
        %v676 = vpop.f32.mrf.mxu0
        %677 = vmatprep.mubr.f32.mxu0 0.0
        %678 = vmatmul.mubr.f32.gmra.mxu0 %v535
        %v679 = vpop.f32.mrf.mxu0
        %v680 = vadd.f32 %v566, %v679
        %v681 = vpop.f32.mrf.mxu0
        %682 = vmatprep.mubr.f32.mxu0 0.0
        %683 = vmatmul.mubr.f32.gmra.mxu0 %v536
        %v684 = vpop.f32.mrf.mxu0
        %v685 = vadd.f32 %v566, %v684
        %v686 = vpop.f32.mrf.mxu0
        %687 = vmatprep.mubr.f32.mxu0 0.0
        %688 = vmatmul.mubr.f32.gmra.mxu0 %v537
        %v689 = vpop.f32.mrf.mxu0
        %v690 = vadd.f32 %v566, %v689
        %v691 = vpop.f32.mrf.mxu0
        %692 = vmatprep.mubr.f32.mxu0 0.0
        %693 = vmatmul.mubr.f32.gmra.mxu0 %v538
        %v694 = vpop.f32.mrf.mxu0
        %v695 = vadd.f32 %v566, %v694
        %v696 = vpop.f32.mrf.mxu0
        %697 = vmatprep.mubr.f32.mxu0 0.0
        %698 = vmatmul.mubr.f32.gmra.mxu0 %v539
        %v699 = vpop.f32.mrf.mxu0
        %v700 = vadd.f32 %v566, %v699
        %v701 = vpop.f32.mrf.mxu0
        %702 = vmatprep.mubr.f32.mxu0 0.0
        %703 = vmatmul.mubr.f32.gmra.mxu0 %v540
        %v704 = vpop.f32.mrf.mxu0
        %v705 = vadd.f32 %v566, %v704
        %v706 = vpop.f32.mrf.mxu0
        %707 = vmatprep.mubr.f32.mxu0 0.0
        %708 = vmatmul.mubr.f32.gmra.mxu0 %v541
        %v709 = vpop.f32.mrf.mxu0
        %v710 = vadd.f32 %v566, %v709
        %v711 = vpop.f32.mrf.mxu0
        %712 = vmatprep.mubr.f32.mxu0 0.0
        %713 = vmatmul.mubr.f32.gmra.mxu0 %v542
        %v714 = vpop.f32.mrf.mxu0
        %v715 = vadd.f32 %v566, %v714
        %v716 = vpop.f32.mrf.mxu0
        %717 = vmatprep.mubr.f32.mxu0 0.0
        %718 = vmatmul.mubr.f32.gmra.mxu0 %v543
        %v719 = vpop.f32.mrf.mxu0
        %v720 = vadd.f32 %v566, %v719
        %v721 = vpop.f32.mrf.mxu0
        %722 = vmatprep.mubr.f32.mxu0 0.0
        %723 = vmatmul.mubr.f32.gmra.mxu0 %v544
        %v724 = vpop.f32.mrf.mxu0
        %v725 = vadd.f32 %v566, %v724
        %v726 = vpop.f32.mrf.mxu0
        %727 = vdwg.mxu0
        %v728 = vmax.f32 %v635, 0.0
        %v729 = vmax.f32 %v640, 0.0
        %v730 = vmax.f32 %v645, 0.0
        %v731 = vmax.f32 %v650, 0.0
        %v732 = vmax.f32 %v655, 0.0
        %v733 = vmax.f32 %v660, 0.0
        %v734 = vmax.f32 %v665, 0.0
        %v735 = vmax.f32 %v670, 0.0
        %v736 = vmax.f32 %v675, 0.0
        %v737 = vmax.f32 %v680, 0.0
        %v738 = vmax.f32 %v685, 0.0
        %v739 = vmax.f32 %v690, 0.0
        %v740 = vmax.f32 %v695, 0.0
        %v741 = vmax.f32 %v700, 0.0
        %v742 = vmax.f32 %v705, 0.0
        %v743 = vmax.f32 %v710, 0.0
        %v744 = vmax.f32 %v715, 0.0
        %v745 = vmax.f32 %v720, 0.0
        %v746 = vmax.f32 %v725, 0.0
        %v747 = vld [vmem:[%s5] sm:$0xff]
        %v748 = vld [vmem:[%s5 + $0x8] sm:$0xff]
        %v749 = vld [vmem:[%s5 + $0x10] sm:$0xff]
        %v750 = vld [vmem:[%s5 + $0x18] sm:$0xff]
        %v751 = vld [vmem:[%s5 + $0x20] sm:$0xff]
        %v752 = vld [vmem:[%s5 + $0x28] sm:$0xff]
        %v753 = vld [vmem:[%s5 + $0x30] sm:$0xff]
        %v754 = vld [vmem:[%s5 + $0x38] sm:$0xff]
        %v755 = vld [vmem:[%s5 + $0x40] sm:$0xff]
        %v756 = vld [vmem:[%s5 + $0x48] sm:$0xff]
        %v757 = vld [vmem:[%s5 + $0x50] sm:$0xff]
        %v758 = vld [vmem:[%s5 + $0x58] sm:$0xff]
        %v759 = vld [vmem:[%s5 + $0x60] sm:$0xff]
        %v760 = vld [vmem:[%s5 + $0x68] sm:$0xff]
        %v761 = vld [vmem:[%s5 + $0x70] sm:$0xff]
        %v762 = vld [vmem:[%s5 + $0x78] sm:$0xff]
        %v763 = vld [vmem:[%s6] sm:$0x1]
        %v765 = vlaneseq
        %v766 = vshrl.u32 %v765, 7
        %v767 = vsub.s32 0, %v766
        %v768 = vrot.slane %v763, %v767
        %770 = vmatprep.subr.mxu0 0.0
        %771 = vmatpush1.msra.mxu0 %v762
        %772 = vmatprep.subr.mxu0 0.0
        %773 = vmatpush1.msra.mxu0 %v761
        %774 = vmatprep.subr.mxu0 0.0
        %775 = vmatpush1.msra.mxu0 %v760
        %776 = vmatprep.subr.mxu0 0.0
        %777 = vmatpush1.msra.mxu0 %v759
        %778 = vmatprep.subr.mxu0 0.0
        %779 = vmatpush1.msra.mxu0 %v758
        %780 = vmatprep.subr.mxu0 0.0
        %781 = vmatpush1.msra.mxu0 %v757
        %782 = vmatprep.subr.mxu0 0.0
        %783 = vmatpush1.msra.mxu0 %v756
        %784 = vmatprep.subr.mxu0 0.0
        %785 = vmatpush1.msra.mxu0 %v755
        %786 = vmatprep.subr.mxu0 0.0
        %787 = vmatpush1.msra.mxu0 %v754
        %788 = vmatprep.subr.mxu0 0.0
        %789 = vmatpush1.msra.mxu0 %v753
        %790 = vmatprep.subr.mxu0 0.0
        %791 = vmatpush1.msra.mxu0 %v752
        %792 = vmatprep.subr.mxu0 0.0
        %793 = vmatpush1.msra.mxu0 %v751
        %794 = vmatprep.subr.mxu0 0.0
        %795 = vmatpush1.msra.mxu0 %v750
        %796 = vmatprep.subr.mxu0 0.0
        %797 = vmatpush1.msra.mxu0 %v749
        %798 = vmatprep.subr.mxu0 0.0
        %799 = vmatpush1.msra.mxu0 %v748
        %800 = vmatprep.subr.mxu0 0.0
        %801 = vmatpush1.msra.mxu0 %v747
        %802 = vmatprep.subr.mxu0 0.0
        %803 = vmatpush2.msra.mxu0 0.0
        %804 = vmatprep.subr.mxu0 0.0
        %805 = vmatpush2.msra.mxu0 0.0
        %806 = vmatprep.subr.mxu0 0.0
        %807 = vmatpush2.msra.mxu0 0.0
        %808 = vmatprep.subr.mxu0 0.0
        %809 = vmatpush2.msra.mxu0 0.0
        %810 = vmatprep.subr.mxu0 0.0
        %811 = vmatpush2.msra.mxu0 0.0
        %812 = vmatprep.subr.mxu0 0.0
        %813 = vmatpush2.msra.mxu0 0.0
        %814 = vmatprep.subr.mxu0 0.0
        %815 = vmatpush2.msra.mxu0 0.0
        %816 = vmatprep.subr.mxu0 0.0
        %817 = vmatpush2.msra.mxu0 0.0
        %818 = vmatprep.subr.mxu0 0.0
        %819 = vmatpush2.msra.mxu0 0.0
        %820 = vmatprep.subr.mxu0 0.0
        %821 = vmatpush2.msra.mxu0 0.0
        %822 = vmatprep.subr.mxu0 0.0
        %823 = vmatpush2.msra.mxu0 0.0
        %824 = vmatprep.subr.mxu0 0.0
        %825 = vmatpush2.msra.mxu0 0.0
        %826 = vmatprep.subr.mxu0 0.0
        %827 = vmatpush2.msra.mxu0 0.0
        %828 = vmatprep.subr.mxu0 0.0
        %829 = vmatpush2.msra.mxu0 0.0
        %830 = vmatprep.subr.mxu0 0.0
        %831 = vmatpush2.msra.mxu0 0.0
        %832 = vmatprep.subr.mxu0 0.0
        %833 = vmatpush2.msra.mxu0 0.0
        %834 = vmatprep.mubr.f32.mxu0 0.0
        %835 = vmatmul.mubr.f32.gmra.mxu0 %v728
        %v836 = vpop.f32.mrf.mxu0
        %v837 = vadd.f32 %v768, %v836
        %v838 = vpop.f32.mrf.mxu0
        %839 = vmatprep.mubr.f32.mxu0 0.0
        %840 = vmatmul.mubr.f32.gmra.mxu0 %v729
        %v841 = vpop.f32.mrf.mxu0
        %v842 = vadd.f32 %v768, %v841
        %v843 = vpop.f32.mrf.mxu0
        %844 = vmatprep.mubr.f32.mxu0 0.0
        %845 = vmatmul.mubr.f32.gmra.mxu0 %v730
        %v846 = vpop.f32.mrf.mxu0
        %v847 = vadd.f32 %v768, %v846
        %v848 = vpop.f32.mrf.mxu0
        %849 = vmatprep.mubr.f32.mxu0 0.0
        %850 = vmatmul.mubr.f32.gmra.mxu0 %v731
        %v851 = vpop.f32.mrf.mxu0
        %v852 = vadd.f32 %v768, %v851
        %v853 = vpop.f32.mrf.mxu0
        %854 = vmatprep.mubr.f32.mxu0 0.0
        %855 = vmatmul.mubr.f32.gmra.mxu0 %v732
        %v856 = vpop.f32.mrf.mxu0
        %v857 = vadd.f32 %v768, %v856
        %v858 = vpop.f32.mrf.mxu0
        %859 = vmatprep.mubr.f32.mxu0 0.0
        %860 = vmatmul.mubr.f32.gmra.mxu0 %v733
        %v861 = vpop.f32.mrf.mxu0
        %v862 = vadd.f32 %v768, %v861
        %v863 = vpop.f32.mrf.mxu0
        %864 = vmatprep.mubr.f32.mxu0 0.0
        %865 = vmatmul.mubr.f32.gmra.mxu0 %v734
        %v866 = vpop.f32.mrf.mxu0
        %v867 = vadd.f32 %v768, %v866
        %v868 = vpop.f32.mrf.mxu0
        %869 = vmatprep.mubr.f32.mxu0 0.0
        %870 = vmatmul.mubr.f32.gmra.mxu0 %v735
        %v871 = vpop.f32.mrf.mxu0
        %v872 = vadd.f32 %v768, %v871
        %v873 = vpop.f32.mrf.mxu0
        %874 = vmatprep.mubr.f32.mxu0 0.0
        %875 = vmatmul.mubr.f32.gmra.mxu0 %v736
        %v876 = vpop.f32.mrf.mxu0
        %v877 = vadd.f32 %v768, %v876
        %v878 = vpop.f32.mrf.mxu0
        %879 = vmatprep.mubr.f32.mxu0 0.0
        %880 = vmatmul.mubr.f32.gmra.mxu0 %v737
        %v881 = vpop.f32.mrf.mxu0
        %v882 = vadd.f32 %v768, %v881
        %v883 = vpop.f32.mrf.mxu0
        %884 = vmatprep.mubr.f32.mxu0 0.0
        %885 = vmatmul.mubr.f32.gmra.mxu0 %v738
        %v886 = vpop.f32.mrf.mxu0
        %v887 = vadd.f32 %v768, %v886
        %v888 = vpop.f32.mrf.mxu0
        %889 = vmatprep.mubr.f32.mxu0 0.0
        %890 = vmatmul.mubr.f32.gmra.mxu0 %v739
        %v891 = vpop.f32.mrf.mxu0
        %v892 = vadd.f32 %v768, %v891
        %v893 = vpop.f32.mrf.mxu0
        %894 = vmatprep.mubr.f32.mxu0 0.0
        %895 = vmatmul.mubr.f32.gmra.mxu0 %v740
        %v896 = vpop.f32.mrf.mxu0
        %v897 = vadd.f32 %v768, %v896
        %v898 = vpop.f32.mrf.mxu0
        %899 = vmatprep.mubr.f32.mxu0 0.0
        %900 = vmatmul.mubr.f32.gmra.mxu0 %v741
        %v901 = vpop.f32.mrf.mxu0
        %v902 = vadd.f32 %v768, %v901
        %v903 = vpop.f32.mrf.mxu0
        %904 = vmatprep.mubr.f32.mxu0 0.0
        %905 = vmatmul.mubr.f32.gmra.mxu0 %v742
        %v906 = vpop.f32.mrf.mxu0
        %v907 = vadd.f32 %v768, %v906
        %v908 = vpop.f32.mrf.mxu0
        %909 = vmatprep.mubr.f32.mxu0 0.0
        %910 = vmatmul.mubr.f32.gmra.mxu0 %v743
        %v911 = vpop.f32.mrf.mxu0
        %v912 = vadd.f32 %v768, %v911
        %v913 = vpop.f32.mrf.mxu0
        %914 = vmatprep.mubr.f32.mxu0 0.0
        %915 = vmatmul.mubr.f32.gmra.mxu0 %v744
        %v916 = vpop.f32.mrf.mxu0
        %v917 = vadd.f32 %v768, %v916
        %v918 = vpop.f32.mrf.mxu0
        %919 = vmatprep.mubr.f32.mxu0 0.0
        %920 = vmatmul.mubr.f32.gmra.mxu0 %v745
        %v921 = vpop.f32.mrf.mxu0
        %v922 = vadd.f32 %v768, %v921
        %v923 = vpop.f32.mrf.mxu0
        %924 = vmatprep.mubr.f32.mxu0 0.0
        %925 = vmatmul.mubr.f32.gmra.mxu0 %v746
        %v926 = vpop.f32.mrf.mxu0
        %v927 = vadd.f32 %v768, %v926
        %v928 = vpop.f32.mrf.mxu0
        %929 = vdwg.mxu0
        %930 = vst [vmem:[%s272] sm:$0xff] %v837
        %931 = vst [vmem:[%s272 + $0x8] sm:$0xff] %v842
        %932 = vst [vmem:[%s272 + $0x10] sm:$0xff] %v847
        %933 = vst [vmem:[%s272 + $0x18] sm:$0xff] %v852
        %934 = vst [vmem:[%s272 + $0x20] sm:$0xff] %v857
        %935 = vst [vmem:[%s272 + $0x28] sm:$0xff] %v862
        %936 = vst [vmem:[%s272 + $0x30] sm:$0xff] %v867
        %937 = vst [vmem:[%s272 + $0x38] sm:$0xff] %v872
        %938 = vst [vmem:[%s272 + $0x40] sm:$0xff] %v877
        %939 = vst [vmem:[%s272 + $0x48] sm:$0xff] %v882
        %940 = vst [vmem:[%s272 + $0x50] sm:$0xff] %v887
        %941 = vst [vmem:[%s272 + $0x58] sm:$0xff] %v892
        %942 = vst [vmem:[%s272 + $0x60] sm:$0xff] %v897
        %943 = vst [vmem:[%s272 + $0x68] sm:$0xff] %v902
        %944 = vst [vmem:[%s272 + $0x70] sm:$0xff] %v907
        %945 = vst [vmem:[%s272 + $0x78] sm:$0xff] %v912
        %946 = vst [vmem:[%s272 + $0x80] sm:$0xff] %v917
        %947 = vst [vmem:[%s272 + $0x88] sm:$0xff] %v922
        %948 = vst [vmem:[%s272 + $0x90] sm:$0xff] %v927
        %s949 = sand.u32 %s181, 1
        %s950 = scalar_lea.sflag [#allocation3], %s949
        %s951 = sand.u32 %s181, 1
        %s952 = smul.addr %s951, 152
        %s953 = scalar_lea.vmem [#allocation2], %s952
        // Predicated region
        $region49: #{tpu_custom_call.1} parent=47 // pred_check
          %p954 = pneg %p191
        $region50: #{tpu_custom_call.1} parent=47 // pred_check_branch
          %956 = sbr.rel (%p954) target = $region52
        $region51: #{tpu_custom_call.1} parent=47 // pred_region
          %s957 = smul.u32 19, %s21
          %s959 = ssub.s32 2432, 2432
          %960 = vsyncadd %s950, %s959
          %s961 = smul.addr %s957, 128
          %s962 = scalar_lea.hbm %s7, %s961
          %s963 = sshll.u32 %s953, 4
          %s964 = int_to_ptr.vmem [resolvable:$true] %s963
          %969 = dma.vmem_to_hbm [thread:$0]  %s964, 2432, %s962, %s950, 128, 128, 8
        $region52: #{tpu_custom_call.1} parent=47 // pred_fallthru
          _
      $region48: #{tpu_custom_call.1} parent=5 // pred_fallthru
        _
      %p970 = scmp.le.s32.totalorder 2, %s16
      // Predicated region
      $region53: #{tpu_custom_call.1} parent=5 // pred_check
        %p971 = pneg %p970
      $region54: #{tpu_custom_call.1} parent=5 // pred_check_branch
        %973 = sbr.rel (%p971) target = $region56
      $region55: #{tpu_custom_call.1} parent=5 // pred_region
        %s974 = ssub.s32 %s16, 2
        // Predicated region
        $region57: #{tpu_custom_call.1} parent=55 // pred_check
          %p975 = pneg %p197
        $region58: #{tpu_custom_call.1} parent=55 // pred_check_branch
          %977 = sbr.rel (%p975) target = $region60
        $region59: #{tpu_custom_call.1} parent=55 // pred_region
          %s978 = sand.u32 %s182, 1
          %s979 = scalar_lea.sflag [#allocation3], %s978
          %s980 = sand.u32 %s182, 1
          %s981 = smul.addr %s980, 152
          %s982 = scalar_lea.vmem [#allocation2], %s981
          %983 = dma.done %s979, 2432
        $region60: #{tpu_custom_call.1} parent=55 // pred_fallthru
          _
      $region56: #{tpu_custom_call.1} parent=5 // pred_fallthru
        _
    $region6: #{tpu_custom_call.1} parent=1 // loop_footer
      %s20 = sadd.s32 1, %s16
    $region7: #{tpu_custom_call.1} parent=1 // loop_footer_branch
      %15 = sbr.rel target = $region3
    $region8: #{tpu_custom_call.1} parent=1 // loop_exit
      _
    %984 = vsyncpa [#allocation3], 1
    %s985 = scalar_lea.sflag [#allocation3], 1
    %986 = vsyncpa %s985, 1

</llo_original>
